<compile_context>
chip_gen: v7x
topology: tpu7x:2x2x1
jax: 0.10.0
libtpu: 0.0.40
codegen_flags: <defaults>
</compile_context>

<pallas_src>
import numpy as np
import jax
import jax.numpy as jnp
from jax.experimental import pallas as pl
from jax.experimental.pallas import tpu as pltpu

# ----- synthetic feature configuration (mirrors the constants of the PyTorch model) -----
SINGLE_ID_FEATURES = ["userid", "feedid", "authorid"]
MULTI_ID_FEATURES = ["feedid_user_sequence", "authorid_seq"]
DENSE_FEATURES = ["d0", "d1", "d2", "d3"]

EMB = 16           # embedding_size
SEQ = 6            # multi-id sequence length
H1, H2 = 200, 80   # hidden_size = [200, 80, 1]
H1P, H2P = 256, 128  # lane-aligned padded hidden sizes (zero-padded -> numerically exact)
CLASS_NUM = 3      # config.class_num
VOCAB = 50         # per-feature vocab size
BN_EPS = 1e-5
DIN = EMB * (len(SINGLE_ID_FEATURES) + len(MULTI_ID_FEATURES)) + len(DENSE_FEATURES)  # 84


# --------------------------------- Pallas kernel ----------------------------------------
def mlp_kernel(x_ref, w1_ref, b1_ref, w2_ref, b2_ref, w3_ref, b3_ref, out_ref):
    # x_ref : [TB, Din]           merged features (lane-dense)
    # w1_ref: [Din, C*H1P]        BN-folded, head-stacked layer-1 weights
    # b1_ref: [1, C*H1P]
    # w2_ref: [C, H1P, H2P]       BN-folded layer-2 weights (zero-padded)
    # b2_ref: [C, 1, H2P]
    # w3_ref: [C, 1, H2P]         layer-3 weights as a row vector per head
    # b3_ref: [C, 1, 1]
    # out_ref: [TB, C]
    n_heads, h1p, _ = w2_ref.shape

    # layer 1 for all heads: one MXU pass with C*H1P output columns
    h1 = jnp.dot(x_ref[...], w1_ref[...], preferred_element_type=jnp.float32)
    h1 = jnp.maximum(h1 + b1_ref[...], 0.0)                     # [TB, C*H1P]

    cols = []
    for c in range(n_heads):
        hc = h1[:, c * h1p:(c + 1) * h1p]                       # 128-lane-aligned slice
        hc = jnp.dot(hc, w2_ref[c], preferred_element_type=jnp.float32)
        hc = jnp.maximum(hc + b2_ref[c], 0.0)                   # [TB, H2P]
        # Linear(H2 -> 1): VPU multiply + lane reduction (no 1-column MXU push)
        logit = jnp.sum(hc * w3_ref[c], axis=-1, keepdims=True) + b3_ref[c]
        cols.append(jax.nn.sigmoid(logit))                      # [TB, 1]
    out_ref[...] = jnp.concatenate(cols, axis=1)                # [TB, C]


def mlp_heads_pallas(merged, kp):
    B, din = merged.shape
    C, h1p, h2p = kp["W2"].shape
    tb = min(B, 256)                     # 256 fits VMEM comfortably even on v7x (64 MiB)
    grid = (pl.cdiv(B, tb),)

    in_specs = [
        pl.BlockSpec((tb, din), lambda i: (i, 0)),              # activations: batch-tiled
        pl.BlockSpec((din, C * h1p), lambda i: (0, 0)),         # weights: VMEM-resident
        pl.BlockSpec((1, C * h1p), lambda i: (0, 0)),
        pl.BlockSpec((C, h1p, h2p), lambda i: (0, 0, 0)),
        pl.BlockSpec((C, 1, h2p), lambda i: (0, 0, 0)),
        pl.BlockSpec((C, 1, h2p), lambda i: (0, 0, 0)),
        pl.BlockSpec((C, 1, 1), lambda i: (0, 0, 0)),
    ]
    out_specs = pl.BlockSpec((tb, C), lambda i: (i, 0))

    return pl.pallas_call(
        mlp_kernel,
        out_shape=jax.ShapeDtypeStruct((B, C), jnp.float32),
        grid=grid,
        in_specs=in_specs,
        out_specs=out_specs,
        compiler_params=pltpu.CompilerParams(
            dimension_semantics=("parallel",)),                 # megacore batch split
    )(merged, kp["W1"], kp["B1"], kp["W2"], kp["B2"], kp["W3"], kp["B3"])


# ---------------------- pack: fold BN, pad to lane-aligned, stack heads ------------------
def pack_kernel_params(params):
    C = params["w1"].shape[0]
    # fold eval-mode BatchNorm (scale s, shift t) into the preceding Linear
    w1f = params["w1"] * params["s1"]                 # [C, Din, H1]
    b1f = params["b1"] * params["s1"] + params["t1"]  # [C, 1, H1]
    w2f = params["w2"] * params["s2"]                 # [C, H1, H2]
    b2f = params["b2"] * params["s2"] + params["t2"]  # [C, 1, H2]

    # zero-pad hidden dims to lane-aligned sizes (exact: relu(0)=0, padded weights=0)
    w1p = jnp.pad(w1f, ((0, 0), (0, 0), (0, H1P - H1)))           # [C, Din, H1P]
    b1p = jnp.pad(b1f, ((0, 0), (0, 0), (0, H1P - H1)))           # [C, 1, H1P]
    w2p = jnp.pad(w2f, ((0, 0), (0, H1P - H1), (0, H2P - H2)))    # [C, H1P, H2P]
    b2p = jnp.pad(b2f, ((0, 0), (0, 0), (0, H2P - H2)))           # [C, 1, H2P]
    w3p = jnp.pad(params["w3"], ((0, 0), (0, H2P - H2), (0, 0)))  # [C, H2P, 1]

    W1 = jnp.transpose(w1p, (1, 0, 2)).reshape(DIN, C * H1P)      # [Din, C*H1P]
    B1 = b1p.reshape(1, C * H1P)                                  # [1, C*H1P]
    W3 = jnp.transpose(w3p, (0, 2, 1))                            # [C, 1, H2P]
    return dict(W1=W1, B1=B1, W2=w2p, B2=b2p, W3=W3, B3=params["b3"])


# ------------------------- JAX glue (embeddings + feature merge) -------------------------
def forward(params, kernel_params, dense_features, single_id_concat, multi_id_concat,
            mask_concat):
    # single_id_concat: [B, 1, S] int32 ; multi_id_concat: [B, L, M] int32
    del mask_concat  # unused by the reference forward (max is taken unmasked)
    feats = []
    for i in range(len(SINGLE_ID_FEATURES)):
        ids = single_id_concat[:, :, i].squeeze(axis=1)                      # [B]
        feats.append(jnp.take(params["single_tables"][i], ids, axis=0))      # [B, E]
    for i in range(len(MULTI_ID_FEATURES)):
        ids = multi_id_concat[:, :, i]                                       # [B, L]
        emb = jnp.take(params["multi_tables"][i], ids, axis=0)               # [B, L, E]
        feats.append(jnp.max(emb, axis=1))                                   # [B, E]
    feats.append(dense_features.astype(jnp.float32))                         # [B, Dd]
    merged = jnp.concatenate(feats, axis=1)                                  # [B, Din]
    # TODO(synk): embedding gathers could be fused in-kernel via PrefetchScalarGridSpec;
    # kept as XLA glue here.
    return mlp_heads_pallas(merged, kernel_params)


# ----------------------------------- parameters -----------------------------------------
def init_params(key):
    keys = iter(jax.random.split(key, 32))
    C = CLASS_NUM

    def xavier(k, shape):  # nn.init.xavier_normal_, gain=1.0
        std = float(np.sqrt(2.0 / (shape[-2] + shape[-1])))
        return jax.random.normal(k, shape, jnp.float32) * std

    def emb_table(k, pretrained):
        if pretrained:  # "pretrained_feed_emb.npy" stand-in
            return jax.random.normal(k, (VOCAB, EMB), jnp.float32) * 0.1
        t = jax.random.normal(k, (VOCAB, EMB), jnp.float32) * 1e-4
        return t.at[0].set(0.0)  # padding_idx=0

    single_tables = [emb_table(next(keys), "feedid" in f) for f in SINGLE_ID_FEATURES]
    multi_tables = [emb_table(next(keys), "feedid" in f) for f in MULTI_ID_FEATURES]

    bn_scale = 1.0 / np.sqrt(1.0 + BN_EPS)  # eval-mode BN with default running stats
    # NOTE: reference deep-copies one head so heads start identical; we draw distinct
    # (deterministic) heads of the same shapes — forward semantics are unchanged.
    return dict(
        single_tables=single_tables,
        multi_tables=multi_tables,
        w1=xavier(next(keys), (C, DIN, H1)),
        b1=jnp.zeros((C, 1, H1), jnp.float32),
        s1=jnp.full((C, 1, H1), bn_scale, jnp.float32),
        t1=jnp.zeros((C, 1, H1), jnp.float32),
        w2=xavier(next(keys), (C, H1, H2)),
        b2=jnp.zeros((C, 1, H2), jnp.float32),
        s2=jnp.full((C, 1, H2), bn_scale, jnp.float32),
        t2=jnp.zeros((C, 1, H2), jnp.float32),
        w3=xavier(next(keys), (C, H2, 1)),
        b3=jnp.zeros((C, 1, 1), jnp.float32),
    )


# ------------------------------ pure-JAX reference check --------------------------------
def reference_forward(params, dense, single_ids, multi_ids, mask):
    del mask
    single_embs = [jnp.take(params["single_tables"][i],
                            single_ids[:, :, i].squeeze(axis=1), axis=0)
                   for i in range(len(SINGLE_ID_FEATURES))]
    multi_max = [jnp.max(jnp.take(params["multi_tables"][i], multi_ids[:, :, i], axis=0),
                         axis=1)
                 for i in range(len(MULTI_ID_FEATURES))]
    merged = jnp.concatenate(single_embs + multi_max + [dense.astype(jnp.float32)], axis=1)
    outs = []
    for c in range(CLASS_NUM):
        h = merged @ params["w1"][c] + params["b1"][c]
        h = jnp.maximum(h * params["s1"][c] + params["t1"][c], 0.0)
        h = h @ params["w2"][c] + params["b2"][c]
        h = jnp.maximum(h * params["s2"][c] + params["t2"][c], 0.0)
        h = h @ params["w3"][c] + params["b3"][c]
        outs.append(jax.nn.sigmoid(h))
    return jnp.concatenate(outs, axis=1)


if __name__ == "__main__":
    key = jax.random.PRNGKey(0)
    pk, dk, sk, mk = jax.random.split(key, 4)
    params = init_params(pk)
    kernel_params = pack_kernel_params(params)   # BN-folded / padded / head-stacked

    B = 8
    dense_features = jax.random.normal(dk, (B, len(DENSE_FEATURES)), jnp.float32)
    single_id_concat = jax.random.randint(
        sk, (B, 1, len(SINGLE_ID_FEATURES)), 0, VOCAB, jnp.int32)
    multi_id_concat = jax.random.randint(
        mk, (B, SEQ, len(MULTI_ID_FEATURES)), 0, VOCAB, jnp.int32)
    mask_concat = (multi_id_concat > 0).astype(jnp.float32)   # unused, as in reference

    fwd = jax.jit(forward)
    out = fwd(params, kernel_params, dense_features, single_id_concat,
              multi_id_concat, mask_concat)
    out = jax.block_until_ready(out)

    ref = reference_forward(params, dense_features, single_id_concat,
                            multi_id_concat, mask_concat)
    assert out.shape == (B, CLASS_NUM), out.shape
    np.testing.assert_allclose(np.asarray(out), np.asarray(ref), rtol=2e-2, atol=2e-3)
    print("KERNEL_OK")
</pallas_src>

<mosaic_0001>
module attributes {stable_mosaic.version = 11 : i64} {
  func.func @mlp_kernel(%arg0: i32, %arg1: memref<8x84xf32, #tpu.memory_space<vmem>>, %arg2: memref<84x768xf32, #tpu.memory_space<vmem>>, %arg3: memref<1x768xf32, #tpu.memory_space<vmem>>, %arg4: memref<3x256x128xf32, #tpu.memory_space<vmem>>, %arg5: memref<3x1x128xf32, #tpu.memory_space<vmem>>, %arg6: memref<3x1x128xf32, #tpu.memory_space<vmem>>, %arg7: memref<3x1x1xf32, #tpu.memory_space<vmem>>, %arg8: memref<8x3xf32, #tpu.memory_space<vmem>>) attributes {dimension_semantics = [#tpu.dimension_semantics<parallel>], iteration_bounds = array<i64: 1>, scalar_prefetch = 0 : i64, scratch_operands = 0 : i64, tpu.core_type = #tpu.core_type<tc>, window_params = [{transform_indices = @transform_0, window_bounds = array<i64: 8, 84>}, {pipeline_mode = #tpu.pipeline_mode<synchronous>, transform_indices = @transform_1, window_bounds = array<i64: 84, 768>}, {pipeline_mode = #tpu.pipeline_mode<synchronous>, transform_indices = @transform_2, window_bounds = array<i64: 1, 768>}, {pipeline_mode = #tpu.pipeline_mode<synchronous>, transform_indices = @transform_3, window_bounds = array<i64: 3, 256, 128>}, {pipeline_mode = #tpu.pipeline_mode<synchronous>, transform_indices = @transform_4, window_bounds = array<i64: 3, 1, 128>}, {pipeline_mode = #tpu.pipeline_mode<synchronous>, transform_indices = @transform_5, window_bounds = array<i64: 3, 1, 128>}, {pipeline_mode = #tpu.pipeline_mode<synchronous>, transform_indices = @transform_6, window_bounds = array<i64: 3, 1, 1>}, {transform_indices = @transform_7, window_bounds = array<i64: 8, 3>}]} {
    %c0 = arith.constant 0 : index
    %c0_0 = arith.constant 0 : index
    %0 = vector.load %arg1[%c0, %c0_0] : memref<8x84xf32, #tpu.memory_space<vmem>>, vector<8x84xf32>
    %c0_1 = arith.constant 0 : index
    %c0_2 = arith.constant 0 : index
    %1 = vector.load %arg2[%c0_1, %c0_2] : memref<84x768xf32, #tpu.memory_space<vmem>>, vector<84x768xf32>
    %cst = arith.constant dense<0.000000e+00> : vector<8x768xf32>
    %2 = tpu.matmul %0, %1, %cst {dimension_numbers = #tpu.dot_dimension_numbers<[1], [0], [0], [1], [0, 0, 1, 1], [], []>} : vector<8x84xf32>, vector<84x768xf32>, vector<8x768xf32> -> vector<8x768xf32>
    %c0_3 = arith.constant 0 : index
    %c0_4 = arith.constant 0 : index
    %3 = vector.load %arg3[%c0_3, %c0_4] : memref<1x768xf32, #tpu.memory_space<vmem>>, vector<1x768xf32>
    %4 = vector.broadcast %3 : vector<1x768xf32> to vector<8x768xf32>
    %5 = arith.addf %2, %4 : vector<8x768xf32>
    %cst_5 = arith.constant 0.000000e+00 : f32
    %6 = vector.broadcast %cst_5 : f32 to vector<8x768xf32>
    %7 = arith.maximumf %5, %6 : vector<8x768xf32>
    %8 = vector.extract_strided_slice %7 {offsets = [0, 0], sizes = [8, 256], strides = [1, 1]} : vector<8x768xf32> to vector<8x256xf32>
    %c0_6 = arith.constant 0 : index
    %c0_7 = arith.constant 0 : index
    %c0_8 = arith.constant 0 : index
    %9 = vector.load %arg4[%c0_6, %c0_7, %c0_8] : memref<3x256x128xf32, #tpu.memory_space<vmem>>, vector<1x256x128xf32>
    %10 = vector.shape_cast %9 : vector<1x256x128xf32> to vector<256x128xf32>
    %cst_9 = arith.constant dense<0.000000e+00> : vector<8x128xf32>
    %11 = tpu.matmul %8, %10, %cst_9 {dimension_numbers = #tpu.dot_dimension_numbers<[1], [0], [0], [1], [0, 0, 1, 1], [], []>} : vector<8x256xf32>, vector<256x128xf32>, vector<8x128xf32> -> vector<8x128xf32>
    %c0_10 = arith.constant 0 : index
    %c0_11 = arith.constant 0 : index
    %c0_12 = arith.constant 0 : index
    %12 = vector.load %arg5[%c0_10, %c0_11, %c0_12] : memref<3x1x128xf32, #tpu.memory_space<vmem>>, vector<1x1x128xf32>
    %13 = vector.shape_cast %12 : vector<1x1x128xf32> to vector<1x128xf32>
    %14 = vector.broadcast %13 : vector<1x128xf32> to vector<8x128xf32>
    %15 = arith.addf %11, %14 : vector<8x128xf32>
    %cst_13 = arith.constant 0.000000e+00 : f32
    %16 = vector.broadcast %cst_13 : f32 to vector<8x128xf32>
    %17 = arith.maximumf %15, %16 : vector<8x128xf32>
    %c0_14 = arith.constant 0 : index
    %c0_15 = arith.constant 0 : index
    %c0_16 = arith.constant 0 : index
    %18 = vector.load %arg6[%c0_14, %c0_15, %c0_16] : memref<3x1x128xf32, #tpu.memory_space<vmem>>, vector<1x1x128xf32>
    %19 = vector.shape_cast %18 : vector<1x1x128xf32> to vector<1x128xf32>
    %20 = vector.broadcast %19 : vector<1x128xf32> to vector<8x128xf32>
    %21 = arith.mulf %17, %20 : vector<8x128xf32>
    %cst_17 = arith.constant dense<0.000000e+00> : vector<8xf32>
    %22 = vector.multi_reduction <add>, %21, %cst_17 [1] : vector<8x128xf32> to vector<8xf32>
    %23 = vector.shape_cast %22 : vector<8xf32> to vector<8x1xf32>
    %c0_18 = arith.constant 0 : index
    %c0_19 = arith.constant 0 : index
    %c0_20 = arith.constant 0 : index
    %24 = vector.load %arg7[%c0_18, %c0_19, %c0_20] : memref<3x1x1xf32, #tpu.memory_space<vmem>>, vector<1x1x1xf32>
    %25 = vector.shape_cast %24 : vector<1x1x1xf32> to vector<1x1xf32>
    %26 = vector.broadcast %25 : vector<1x1xf32> to vector<8x1xf32>
    %27 = arith.addf %23, %26 : vector<8x1xf32>
    %28 = arith.negf %27 : vector<8x1xf32>
    %29 = math.exp %28 : vector<8x1xf32>
    %cst_21 = arith.constant 1.000000e+00 : f32
    %30 = vector.broadcast %cst_21 : f32 to vector<8x1xf32>
    %31 = arith.addf %30, %29 : vector<8x1xf32>
    %32 = arith.divf %30, %31 : vector<8x1xf32>
    %33 = vector.extract_strided_slice %7 {offsets = [0, 256], sizes = [8, 256], strides = [1, 1]} : vector<8x768xf32> to vector<8x256xf32>
    %c1 = arith.constant 1 : index
    %c0_22 = arith.constant 0 : index
    %c0_23 = arith.constant 0 : index
    %34 = vector.load %arg4[%c1, %c0_22, %c0_23] : memref<3x256x128xf32, #tpu.memory_space<vmem>>, vector<1x256x128xf32>
    %35 = vector.shape_cast %34 : vector<1x256x128xf32> to vector<256x128xf32>
    %cst_24 = arith.constant dense<0.000000e+00> : vector<8x128xf32>
    %36 = tpu.matmul %33, %35, %cst_24 {dimension_numbers = #tpu.dot_dimension_numbers<[1], [0], [0], [1], [0, 0, 1, 1], [], []>} : vector<8x256xf32>, vector<256x128xf32>, vector<8x128xf32> -> vector<8x128xf32>
    %c1_25 = arith.constant 1 : index
    %c0_26 = arith.constant 0 : index
    %c0_27 = arith.constant 0 : index
    %37 = vector.load %arg5[%c1_25, %c0_26, %c0_27] : memref<3x1x128xf32, #tpu.memory_space<vmem>>, vector<1x1x128xf32>
    %38 = vector.shape_cast %37 : vector<1x1x128xf32> to vector<1x128xf32>
    %39 = vector.broadcast %38 : vector<1x128xf32> to vector<8x128xf32>
    %40 = arith.addf %36, %39 : vector<8x128xf32>
    %cst_28 = arith.constant 0.000000e+00 : f32
    %41 = vector.broadcast %cst_28 : f32 to vector<8x128xf32>
    %42 = arith.maximumf %40, %41 : vector<8x128xf32>
    %c1_29 = arith.constant 1 : index
    %c0_30 = arith.constant 0 : index
    %c0_31 = arith.constant 0 : index
    %43 = vector.load %arg6[%c1_29, %c0_30, %c0_31] : memref<3x1x128xf32, #tpu.memory_space<vmem>>, vector<1x1x128xf32>
    %44 = vector.shape_cast %43 : vector<1x1x128xf32> to vector<1x128xf32>
    %45 = vector.broadcast %44 : vector<1x128xf32> to vector<8x128xf32>
    %46 = arith.mulf %42, %45 : vector<8x128xf32>
    %cst_32 = arith.constant dense<0.000000e+00> : vector<8xf32>
    %47 = vector.multi_reduction <add>, %46, %cst_32 [1] : vector<8x128xf32> to vector<8xf32>
    %48 = vector.shape_cast %47 : vector<8xf32> to vector<8x1xf32>
    %c1_33 = arith.constant 1 : index
    %c0_34 = arith.constant 0 : index
    %c0_35 = arith.constant 0 : index
    %49 = vector.load %arg7[%c1_33, %c0_34, %c0_35] : memref<3x1x1xf32, #tpu.memory_space<vmem>>, vector<1x1x1xf32>
    %50 = vector.shape_cast %49 : vector<1x1x1xf32> to vector<1x1xf32>
    %51 = vector.broadcast %50 : vector<1x1xf32> to vector<8x1xf32>
    %52 = arith.addf %48, %51 : vector<8x1xf32>
    %53 = arith.negf %52 : vector<8x1xf32>
    %54 = math.exp %53 : vector<8x1xf32>
    %cst_36 = arith.constant 1.000000e+00 : f32
    %55 = vector.broadcast %cst_36 : f32 to vector<8x1xf32>
    %56 = arith.addf %55, %54 : vector<8x1xf32>
    %57 = arith.divf %55, %56 : vector<8x1xf32>
    %58 = vector.extract_strided_slice %7 {offsets = [0, 512], sizes = [8, 256], strides = [1, 1]} : vector<8x768xf32> to vector<8x256xf32>
    %c2 = arith.constant 2 : index
    %c0_37 = arith.constant 0 : index
    %c0_38 = arith.constant 0 : index
    %59 = vector.load %arg4[%c2, %c0_37, %c0_38] : memref<3x256x128xf32, #tpu.memory_space<vmem>>, vector<1x256x128xf32>
    %60 = vector.shape_cast %59 : vector<1x256x128xf32> to vector<256x128xf32>
    %cst_39 = arith.constant dense<0.000000e+00> : vector<8x128xf32>
    %61 = tpu.matmul %58, %60, %cst_39 {dimension_numbers = #tpu.dot_dimension_numbers<[1], [0], [0], [1], [0, 0, 1, 1], [], []>} : vector<8x256xf32>, vector<256x128xf32>, vector<8x128xf32> -> vector<8x128xf32>
    %c2_40 = arith.constant 2 : index
    %c0_41 = arith.constant 0 : index
    %c0_42 = arith.constant 0 : index
    %62 = vector.load %arg5[%c2_40, %c0_41, %c0_42] : memref<3x1x128xf32, #tpu.memory_space<vmem>>, vector<1x1x128xf32>
    %63 = vector.shape_cast %62 : vector<1x1x128xf32> to vector<1x128xf32>
    %64 = vector.broadcast %63 : vector<1x128xf32> to vector<8x128xf32>
    %65 = arith.addf %61, %64 : vector<8x128xf32>
    %cst_43 = arith.constant 0.000000e+00 : f32
    %66 = vector.broadcast %cst_43 : f32 to vector<8x128xf32>
    %67 = arith.maximumf %65, %66 : vector<8x128xf32>
    %c2_44 = arith.constant 2 : index
    %c0_45 = arith.constant 0 : index
    %c0_46 = arith.constant 0 : index
    %68 = vector.load %arg6[%c2_44, %c0_45, %c0_46] : memref<3x1x128xf32, #tpu.memory_space<vmem>>, vector<1x1x128xf32>
    %69 = vector.shape_cast %68 : vector<1x1x128xf32> to vector<1x128xf32>
    %70 = vector.broadcast %69 : vector<1x128xf32> to vector<8x128xf32>
    %71 = arith.mulf %67, %70 : vector<8x128xf32>
    %cst_47 = arith.constant dense<0.000000e+00> : vector<8xf32>
    %72 = vector.multi_reduction <add>, %71, %cst_47 [1] : vector<8x128xf32> to vector<8xf32>
    %73 = vector.shape_cast %72 : vector<8xf32> to vector<8x1xf32>
    %c2_48 = arith.constant 2 : index
    %c0_49 = arith.constant 0 : index
    %c0_50 = arith.constant 0 : index
    %74 = vector.load %arg7[%c2_48, %c0_49, %c0_50] : memref<3x1x1xf32, #tpu.memory_space<vmem>>, vector<1x1x1xf32>
    %75 = vector.shape_cast %74 : vector<1x1x1xf32> to vector<1x1xf32>
    %76 = vector.broadcast %75 : vector<1x1xf32> to vector<8x1xf32>
    %77 = arith.addf %73, %76 : vector<8x1xf32>
    %78 = arith.negf %77 : vector<8x1xf32>
    %79 = math.exp %78 : vector<8x1xf32>
    %cst_51 = arith.constant 1.000000e+00 : f32
    %80 = vector.broadcast %cst_51 : f32 to vector<8x1xf32>
    %81 = arith.addf %80, %79 : vector<8x1xf32>
    %82 = arith.divf %80, %81 : vector<8x1xf32>
    %83 = tpu.concatenate %32, %57, %82 in 1 : vector<8x1xf32>, vector<8x1xf32>, vector<8x1xf32> -> vector<8x3xf32>
    %c0_52 = arith.constant 0 : index
    %c0_53 = arith.constant 0 : index
    %84 = vector.load %arg8[%c0_52, %c0_53] : memref<8x3xf32, #tpu.memory_space<vmem>>, vector<8x3xf32>
    tpu.vector_store %arg8[%c0_52, %c0_53], %83 {strides = array<i32>} : memref<8x3xf32, #tpu.memory_space<vmem>>, vector<8x3xf32>,
    return
  }
  func.func @transform_0(%arg0: i32) -> (i32, i32) {
    %c0_i32 = arith.constant 0 : i32
    %c0_i32_0 = arith.constant 0 : i32
    return %arg0, %c0_i32 : i32, i32
  }
  func.func @transform_1(%arg0: i32) -> (i32, i32) {
    %c0_i32 = arith.constant 0 : i32
    %c0_i32_0 = arith.constant 0 : i32
    %c0_i32_1 = arith.constant 0 : i32
    return %c0_i32, %c0_i32_0 : i32, i32
  }
  func.func @transform_2(%arg0: i32) -> (i32, i32) {
    %c0_i32 = arith.constant 0 : i32
    %c0_i32_0 = arith.constant 0 : i32
    %c0_i32_1 = arith.constant 0 : i32
    return %c0_i32, %c0_i32_0 : i32, i32
  }
  func.func @transform_3(%arg0: i32) -> (i32, i32, i32) {
    %c0_i32 = arith.constant 0 : i32
    %c0_i32_0 = arith.constant 0 : i32
    %c0_i32_1 = arith.constant 0 : i32
    %c0_i32_2 = arith.constant 0 : i32
    return %c0_i32, %c0_i32_0, %c0_i32_1 : i32, i32, i32
  }
  func.func @transform_4(%arg0: i32) -> (i32, i32, i32) {
    %c0_i32 = arith.constant 0 : i32
    %c0_i32_0 = arith.constant 0 : i32
    %c0_i32_1 = arith.constant 0 : i32
    %c0_i32_2 = arith.constant 0 : i32
    return %c0_i32, %c0_i32_0, %c0_i32_1 : i32, i32, i32
  }
  func.func @transform_5(%arg0: i32) -> (i32, i32, i32) {
    %c0_i32 = arith.constant 0 : i32
    %c0_i32_0 = arith.constant 0 : i32
    %c0_i32_1 = arith.constant 0 : i32
    %c0_i32_2 = arith.constant 0 : i32
    return %c0_i32, %c0_i32_0, %c0_i32_1 : i32, i32, i32
  }
  func.func @transform_6(%arg0: i32) -> (i32, i32, i32) {
    %c0_i32 = arith.constant 0 : i32
    %c0_i32_0 = arith.constant 0 : i32
    %c0_i32_1 = arith.constant 0 : i32
    %c0_i32_2 = arith.constant 0 : i32
    return %c0_i32, %c0_i32_0, %c0_i32_1 : i32, i32, i32
  }
  func.func @transform_7(%arg0: i32) -> (i32, i32) {
    %c0_i32 = arith.constant 0 : i32
    %c0_i32_0 = arith.constant 0 : i32
    return %arg0, %c0_i32 : i32, i32
  }
}

</mosaic_0001>

<llo_original>
// kernel: forward.1
$region0: #{forward.1}
  #allocation0 [shape = 'u32[]', space=smem, size = 0x4, offset = 0x4, fixed_abs, tag = 'smem constant byte address 0x4 - core index']
  #allocation1 [shape = 'u32[144,128]{1,0:T(1,128)}', space=vmem, size = 0x12000, scoped, tag = 'internal scratch']
  %s0 = inlined_call_operand.vmem [shape: f32[8,84], index: 0, kind: input, shape index: {}]
  %s1 = inlined_call_operand.vmem [shape: f32[84,768], index: 1, kind: input, shape index: {}]
  %s2 = inlined_call_operand.vmem [shape: f32[1,768], index: 2, kind: input, shape index: {}]
  %s3 = inlined_call_operand.vmem [shape: f32[3,256,128], index: 3, kind: input, shape index: {}]
  %s4 = inlined_call_operand.vmem [shape: f32[3,1,128], index: 4, kind: input, shape index: {}]
  %s5 = inlined_call_operand.vmem [shape: f32[3,1,128], index: 5, kind: input, shape index: {}]
  %s6 = inlined_call_operand.vmem [shape: f32[3,1,1], index: 6, kind: input, shape index: {}]
  %s7 = inlined_call_operand.vmem [shape: f32[8,3], index: 7, kind: output, shape index: {}]
  %s8 = sld [smem:[#allocation0]]
  $region38: #{forward.1} parent=0
    _
  %s10 = ssub.s32 1, %s8
  %s11 = scalar_select 0, %s10, %s8
  // Predicated region
  $region2: #{forward.1} parent=0 // pred_check
    _
  $region3: #{forward.1} parent=0 // pred_check_branch
    %13 = sbr.rel (0) target = $region5
  $region4: #{forward.1} parent=0 // pred_region
    _
  $region5: #{forward.1} parent=0 // pred_fallthru
    _
  // Predicated region
  $region6: #{forward.1} parent=0 // pred_check
    _
  $region7: #{forward.1} parent=0 // pred_check_branch
    %15 = sbr.rel (0) target = $region9
  $region8: #{forward.1} parent=0 // pred_region
    _
  $region9: #{forward.1} parent=0 // pred_fallthru
    _
  // Predicated region
  $region10: #{forward.1} parent=0 // pred_check
    _
  $region11: #{forward.1} parent=0 // pred_check_branch
    %17 = sbr.rel (0) target = $region13
  $region12: #{forward.1} parent=0 // pred_region
    _
  $region13: #{forward.1} parent=0 // pred_fallthru
    _
  // Predicated region
  $region14: #{forward.1} parent=0 // pred_check
    _
  $region15: #{forward.1} parent=0 // pred_check_branch
    %19 = sbr.rel (0) target = $region17
  $region16: #{forward.1} parent=0 // pred_region
    _
  $region17: #{forward.1} parent=0 // pred_fallthru
    _
  // Predicated region
  $region18: #{forward.1} parent=0 // pred_check
    _
  $region19: #{forward.1} parent=0 // pred_check_branch
    %21 = sbr.rel (0) target = $region21
  $region20: #{forward.1} parent=0 // pred_region
    _
  $region21: #{forward.1} parent=0 // pred_fallthru
    _
  // Predicated region
  $region22: #{forward.1} parent=0 // pred_check
    _
  $region23: #{forward.1} parent=0 // pred_check_branch
    %23 = sbr.rel (0) target = $region25
  $region24: #{forward.1} parent=0 // pred_region
    _
  $region25: #{forward.1} parent=0 // pred_fallthru
    _
  // Predicated region
  $region26: #{forward.1} parent=0 // pred_check
    _
  $region27: #{forward.1} parent=0 // pred_check_branch
    %25 = sbr.rel (0) target = $region29
  $region28: #{forward.1} parent=0 // pred_region
    _
  $region29: #{forward.1} parent=0 // pred_fallthru
    _
  %v26 = vld [vmem:[%s0] sm:$0xff]
  %v27 = vld [vmem:[%s1] sm:$0xff]
  %v28 = vld [vmem:[%s1 + $0x8] sm:$0xff]
  %v29 = vld [vmem:[%s1 + $0x10] sm:$0xff]
  %v30 = vld [vmem:[%s1 + $0x18] sm:$0xff]
  %v31 = vld [vmem:[%s1 + $0x20] sm:$0xff]
  %v32 = vld [vmem:[%s1 + $0x28] sm:$0xff]
  %v33 = vld [vmem:[%s1 + $0x30] sm:$0xff]
  %v34 = vld [vmem:[%s1 + $0x38] sm:$0xff]
  %v35 = vld [vmem:[%s1 + $0x40] sm:$0xff]
  %v36 = vld [vmem:[%s1 + $0x48] sm:$0xff]
  %v37 = vld [vmem:[%s1 + $0x50] sm:$0xff]
  %v38 = vld [vmem:[%s1 + $0x58] sm:$0xff]
  %v39 = vld [vmem:[%s1 + $0x60] sm:$0xff]
  %v40 = vld [vmem:[%s1 + $0x68] sm:$0xff]
  %v41 = vld [vmem:[%s1 + $0x70] sm:$0xff]
  %v42 = vld [vmem:[%s1 + $0x78] sm:$0xff]
  %v43 = vld [vmem:[%s1 + $0x80] sm:$0xff]
  %v44 = vld [vmem:[%s1 + $0x88] sm:$0xff]
  %v45 = vld [vmem:[%s1 + $0x90] sm:$0xff]
  %v46 = vld [vmem:[%s1 + $0x98] sm:$0xff]
  %v47 = vld [vmem:[%s1 + $0xa0] sm:$0xff]
  %v48 = vld [vmem:[%s1 + $0xa8] sm:$0xff]
  %v49 = vld [vmem:[%s1 + $0xb0] sm:$0xff]
  %v50 = vld [vmem:[%s1 + $0xb8] sm:$0xff]
  %v51 = vld [vmem:[%s1 + $0xc0] sm:$0xff]
  %v52 = vld [vmem:[%s1 + $0xc8] sm:$0xff]
  %v53 = vld [vmem:[%s1 + $0xd0] sm:$0xff]
  %v54 = vld [vmem:[%s1 + $0xd8] sm:$0xff]
  %v55 = vld [vmem:[%s1 + $0xe0] sm:$0xff]
  %v56 = vld [vmem:[%s1 + $0xe8] sm:$0xff]
  %v57 = vld [vmem:[%s1 + $0xf0] sm:$0xff]
  %v58 = vld [vmem:[%s1 + $0xf8] sm:$0xff]
  %v59 = vld [vmem:[%s1 + $0x100] sm:$0xff]
  %v60 = vld [vmem:[%s1 + $0x108] sm:$0xff]
  %v61 = vld [vmem:[%s1 + $0x110] sm:$0xff]
  %v62 = vld [vmem:[%s1 + $0x118] sm:$0xff]
  %v63 = vld [vmem:[%s1 + $0x120] sm:$0xff]
  %v64 = vld [vmem:[%s1 + $0x128] sm:$0xff]
  %v65 = vld [vmem:[%s1 + $0x130] sm:$0xff]
  %v66 = vld [vmem:[%s1 + $0x138] sm:$0xff]
  %v67 = vld [vmem:[%s1 + $0x140] sm:$0xff]
  %v68 = vld [vmem:[%s1 + $0x148] sm:$0xff]
  %v69 = vld [vmem:[%s1 + $0x150] sm:$0xff]
  %v70 = vld [vmem:[%s1 + $0x158] sm:$0xff]
  %v71 = vld [vmem:[%s1 + $0x160] sm:$0xff]
  %v72 = vld [vmem:[%s1 + $0x168] sm:$0xff]
  %v73 = vld [vmem:[%s1 + $0x170] sm:$0xff]
  %v74 = vld [vmem:[%s1 + $0x178] sm:$0xff]
  %v75 = vld [vmem:[%s1 + $0x180] sm:$0xff]
  %v76 = vld [vmem:[%s1 + $0x188] sm:$0xff]
  %v77 = vld [vmem:[%s1 + $0x190] sm:$0xff]
  %v78 = vld [vmem:[%s1 + $0x198] sm:$0xff]
  %v79 = vld [vmem:[%s1 + $0x1a0] sm:$0xff]
  %v80 = vld [vmem:[%s1 + $0x1a8] sm:$0xff]
  %v81 = vld [vmem:[%s1 + $0x1b0] sm:$0xff]
  %v82 = vld [vmem:[%s1 + $0x1b8] sm:$0xff]
  %v83 = vld [vmem:[%s1 + $0x1c0] sm:$0xff]
  %v84 = vld [vmem:[%s1 + $0x1c8] sm:$0xff]
  %v85 = vld [vmem:[%s1 + $0x1d0] sm:$0xff]
  %v86 = vld [vmem:[%s1 + $0x1d8] sm:$0xff]
  %v87 = vld [vmem:[%s1 + $0x1e0] sm:$0xf]
  %v88 = vld [vmem:[%s1 + $0x1e8] sm:$0xf]
  %v89 = vld [vmem:[%s1 + $0x1f0] sm:$0xf]
  %v90 = vld [vmem:[%s1 + $0x1f8] sm:$0xf]
  %v91 = vld [vmem:[%s1 + $0x200] sm:$0xf]
  %v92 = vld [vmem:[%s1 + $0x208] sm:$0xf]
  %v93 = vld [vmem:[%s2] sm:$0x3f]
  %v95 = vlaneseq
  %v96 = vshrl.u32 %v95, 7
  %v97 = vsub.s32 0, %v96
  %v98 = vrot.slane %v93, %v97
  %v99 = vlaneseq
  %v100 = vshrl.u32 %v99, 7
  %v101 = vsub.s32 1, %v100
  %v102 = vrot.slane %v93, %v101
  %v103 = vlaneseq
  %v104 = vshrl.u32 %v103, 7
  %v105 = vsub.s32 2, %v104
  %v106 = vrot.slane %v93, %v105
  %v107 = vlaneseq
  %v108 = vshrl.u32 %v107, 7
  %v109 = vsub.s32 3, %v108
  %v110 = vrot.slane %v93, %v109
  %v111 = vlaneseq
  %v112 = vshrl.u32 %v111, 7
  %v113 = vsub.s32 4, %v112
  %v114 = vrot.slane %v93, %v113
  %v115 = vlaneseq
  %v116 = vshrl.u32 %v115, 7
  %v117 = vsub.s32 5, %v116
  %v118 = vrot.slane %v93, %v117
  %vm125 = vcmask 687104
  %v127 = vsel %vm125, %v26, 0
  %vm129 = vcmask 1043456
  %v131 = vsel %vm129, %v87, 0
  %v134 = vsel %vm129, %v88, 0
  %v137 = vsel %vm129, %v89, 0
  %v140 = vsel %vm129, %v90, 0
  %v143 = vsel %vm129, %v91, 0
  %v146 = vsel %vm129, %v92, 0
  %148 = vmatprep.subr.mxu0 %v28
  %149 = vmatpush1.msra.mxu0 %v27
  %150 = vmatprep.subr.mxu0 %v34
  %151 = vmatpush1.msra.mxu0 %v33
  %152 = vmatprep.subr.mxu0 %v40
  %153 = vmatpush1.msra.mxu0 %v39
  %154 = vmatprep.subr.mxu0 %v46
  %155 = vmatpush1.msra.mxu0 %v45
  %156 = vmatprep.subr.mxu0 %v52
  %157 = vmatpush1.msra.mxu0 %v51
  %158 = vmatprep.subr.mxu0 %v58
  %159 = vmatpush1.msra.mxu0 %v57
  %160 = vmatprep.subr.mxu0 %v64
  %161 = vmatpush1.msra.mxu0 %v63
  %162 = vmatprep.subr.mxu0 %v70
  %163 = vmatpush1.msra.mxu0 %v69
  %164 = vmatprep.subr.mxu0 %v76
  %165 = vmatpush1.msra.mxu0 %v75
  %166 = vmatprep.subr.mxu0 %v82
  %167 = vmatpush1.msra.mxu0 %v81
  %168 = vmatprep.subr.mxu0 %v134
  %169 = vmatpush1.msra.mxu0 %v131
  %170 = vmatprep.subr.mxu0 0.0
  %171 = vmatpush1.msra.mxu0 0.0
  %172 = vmatprep.subr.mxu0 0.0
  %173 = vmatpush1.msra.mxu0 0.0
  %174 = vmatprep.subr.mxu0 0.0
  %175 = vmatpush1.msra.mxu0 0.0
  %176 = vmatprep.subr.mxu0 0.0
  %177 = vmatpush1.msra.mxu0 0.0
  %178 = vmatprep.subr.mxu0 0.0
  %179 = vmatpush1.msra.mxu0 0.0
  %180 = vmatprep.subr.mxu0 0.0
  %181 = vmatpush1.msra.mxu0 0.0
  %182 = vmatprep.subr.mxu0 0.0
  %183 = vmatpush1.msra.mxu0 0.0
  %184 = vmatprep.subr.mxu0 0.0
  %185 = vmatpush1.msra.mxu0 0.0
  %186 = vmatprep.subr.mxu0 0.0
  %187 = vmatpush1.msra.mxu0 0.0
  %188 = vmatprep.subr.mxu0 0.0
  %189 = vmatpush1.msra.mxu0 0.0
  %190 = vmatprep.subr.mxu0 0.0
  %191 = vmatpush1.msra.mxu0 0.0
  %192 = vmatprep.subr.mxu0 0.0
  %193 = vmatpush1.msra.mxu0 0.0
  %194 = vmatprep.subr.mxu0 0.0
  %195 = vmatpush1.msra.mxu0 0.0
  %196 = vmatprep.subr.mxu0 0.0
  %197 = vmatpush1.msra.mxu0 0.0
  %198 = vmatprep.subr.mxu0 0.0
  %199 = vmatpush1.msra.mxu0 0.0
  %200 = vmatprep.subr.mxu0 0.0
  %201 = vmatpush1.msra.mxu0 0.0
  %202 = vmatprep.subr.mxu0 0.0
  %203 = vmatpush1.msra.mxu0 0.0
  %204 = vmatprep.subr.mxu0 0.0
  %205 = vmatpush1.msra.mxu0 0.0
  %206 = vmatprep.subr.mxu0 0.0
  %207 = vmatpush1.msra.mxu0 0.0
  %208 = vmatprep.subr.mxu0 0.0
  %209 = vmatpush1.msra.mxu0 0.0
  %210 = vmatprep.subr.mxu0 0.0
  %211 = vmatpush1.msra.mxu0 0.0
  %212 = vmatprep.mubr.f32.mxu0 0.0
  %213 = vmatmul.mubr.f32.gmra.mrb[0].mxu0 %v127
  %v214 = vpop.f32.mrb[0].mxu0
  %v215 = vadd.f32 %v98, %v214
  %v216 = vpop.f32.mrb[0].mxu0
  %v217 = vadd.f32 %v102, %v216
  %218 = vdwg.mxu0
  %219 = vmatprep.subr.mxu0 %v30
  %220 = vmatpush1.msra.mxu0 %v29
  %221 = vmatprep.subr.mxu0 %v36
  %222 = vmatpush1.msra.mxu0 %v35
  %223 = vmatprep.subr.mxu0 %v42
  %224 = vmatpush1.msra.mxu0 %v41
  %225 = vmatprep.subr.mxu0 %v48
  %226 = vmatpush1.msra.mxu0 %v47
  %227 = vmatprep.subr.mxu0 %v54
  %228 = vmatpush1.msra.mxu0 %v53
  %229 = vmatprep.subr.mxu0 %v60
  %230 = vmatpush1.msra.mxu0 %v59
  %231 = vmatprep.subr.mxu0 %v66
  %232 = vmatpush1.msra.mxu0 %v65
  %233 = vmatprep.subr.mxu0 %v72
  %234 = vmatpush1.msra.mxu0 %v71
  %235 = vmatprep.subr.mxu0 %v78
  %236 = vmatpush1.msra.mxu0 %v77
  %237 = vmatprep.subr.mxu0 %v84
  %238 = vmatpush1.msra.mxu0 %v83
  %239 = vmatprep.subr.mxu0 %v140
  %240 = vmatpush1.msra.mxu0 %v137
  %241 = vmatprep.subr.mxu0 0.0
  %242 = vmatpush1.msra.mxu0 0.0
  %243 = vmatprep.subr.mxu0 0.0
  %244 = vmatpush1.msra.mxu0 0.0
  %245 = vmatprep.subr.mxu0 0.0
  %246 = vmatpush1.msra.mxu0 0.0
  %247 = vmatprep.subr.mxu0 0.0
  %248 = vmatpush1.msra.mxu0 0.0
  %249 = vmatprep.subr.mxu0 0.0
  %250 = vmatpush1.msra.mxu0 0.0
  %251 = vmatprep.subr.mxu0 0.0
  %252 = vmatpush1.msra.mxu0 0.0
  %253 = vmatprep.subr.mxu0 0.0
  %254 = vmatpush1.msra.mxu0 0.0
  %255 = vmatprep.subr.mxu0 0.0
  %256 = vmatpush1.msra.mxu0 0.0
  %257 = vmatprep.subr.mxu0 0.0
  %258 = vmatpush1.msra.mxu0 0.0
  %259 = vmatprep.subr.mxu0 0.0
  %260 = vmatpush1.msra.mxu0 0.0
  %261 = vmatprep.subr.mxu0 0.0
  %262 = vmatpush1.msra.mxu0 0.0
  %263 = vmatprep.subr.mxu0 0.0
  %264 = vmatpush1.msra.mxu0 0.0
  %265 = vmatprep.subr.mxu0 0.0
  %266 = vmatpush1.msra.mxu0 0.0
  %267 = vmatprep.subr.mxu0 0.0
  %268 = vmatpush1.msra.mxu0 0.0
  %269 = vmatprep.subr.mxu0 0.0
  %270 = vmatpush1.msra.mxu0 0.0
  %271 = vmatprep.subr.mxu0 0.0
  %272 = vmatpush1.msra.mxu0 0.0
  %273 = vmatprep.subr.mxu0 0.0
  %274 = vmatpush1.msra.mxu0 0.0
  %275 = vmatprep.subr.mxu0 0.0
  %276 = vmatpush1.msra.mxu0 0.0
  %277 = vmatprep.subr.mxu0 0.0
  %278 = vmatpush1.msra.mxu0 0.0
  %279 = vmatprep.subr.mxu0 0.0
  %280 = vmatpush1.msra.mxu0 0.0
  %281 = vmatprep.subr.mxu0 0.0
  %282 = vmatpush1.msra.mxu0 0.0
  %283 = vmatprep.mubr.f32.mxu0 0.0
  %284 = vmatmul.mubr.f32.gmra.mrb[0].mxu0 %v127
  %v285 = vpop.f32.mrb[0].mxu0
  %v286 = vadd.f32 %v106, %v285
  %v287 = vpop.f32.mrb[0].mxu0
  %v288 = vadd.f32 %v110, %v287
  %289 = vdwg.mxu0
  %290 = vmatprep.subr.mxu0 %v32
  %291 = vmatpush1.msra.mxu0 %v31
  %292 = vmatprep.subr.mxu0 %v38
  %293 = vmatpush1.msra.mxu0 %v37
  %294 = vmatprep.subr.mxu0 %v44
  %295 = vmatpush1.msra.mxu0 %v43
  %296 = vmatprep.subr.mxu0 %v50
  %297 = vmatpush1.msra.mxu0 %v49
  %298 = vmatprep.subr.mxu0 %v56
  %299 = vmatpush1.msra.mxu0 %v55
  %300 = vmatprep.subr.mxu0 %v62
  %301 = vmatpush1.msra.mxu0 %v61
  %302 = vmatprep.subr.mxu0 %v68
  %303 = vmatpush1.msra.mxu0 %v67
  %304 = vmatprep.subr.mxu0 %v74
  %305 = vmatpush1.msra.mxu0 %v73
  %306 = vmatprep.subr.mxu0 %v80
  %307 = vmatpush1.msra.mxu0 %v79
  %308 = vmatprep.subr.mxu0 %v86
  %309 = vmatpush1.msra.mxu0 %v85
  %310 = vmatprep.subr.mxu0 %v146
  %311 = vmatpush1.msra.mxu0 %v143
  %312 = vmatprep.subr.mxu0 0.0
  %313 = vmatpush1.msra.mxu0 0.0
  %314 = vmatprep.subr.mxu0 0.0
  %315 = vmatpush1.msra.mxu0 0.0
  %316 = vmatprep.subr.mxu0 0.0
  %317 = vmatpush1.msra.mxu0 0.0
  %318 = vmatprep.subr.mxu0 0.0
  %319 = vmatpush1.msra.mxu0 0.0
  %320 = vmatprep.subr.mxu0 0.0
  %321 = vmatpush1.msra.mxu0 0.0
  %322 = vmatprep.subr.mxu0 0.0
  %323 = vmatpush1.msra.mxu0 0.0
  %324 = vmatprep.subr.mxu0 0.0
  %325 = vmatpush1.msra.mxu0 0.0
  %326 = vmatprep.subr.mxu0 0.0
  %327 = vmatpush1.msra.mxu0 0.0
  %328 = vmatprep.subr.mxu0 0.0
  %329 = vmatpush1.msra.mxu0 0.0
  %330 = vmatprep.subr.mxu0 0.0
  %331 = vmatpush1.msra.mxu0 0.0
  %332 = vmatprep.subr.mxu0 0.0
  %333 = vmatpush1.msra.mxu0 0.0
  %334 = vmatprep.subr.mxu0 0.0
  %335 = vmatpush1.msra.mxu0 0.0
  %336 = vmatprep.subr.mxu0 0.0
  %337 = vmatpush1.msra.mxu0 0.0
  %338 = vmatprep.subr.mxu0 0.0
  %339 = vmatpush1.msra.mxu0 0.0
  %340 = vmatprep.subr.mxu0 0.0
  %341 = vmatpush1.msra.mxu0 0.0
  %342 = vmatprep.subr.mxu0 0.0
  %343 = vmatpush1.msra.mxu0 0.0
  %344 = vmatprep.subr.mxu0 0.0
  %345 = vmatpush1.msra.mxu0 0.0
  %346 = vmatprep.subr.mxu0 0.0
  %347 = vmatpush1.msra.mxu0 0.0
  %348 = vmatprep.subr.mxu0 0.0
  %349 = vmatpush1.msra.mxu0 0.0
  %350 = vmatprep.subr.mxu0 0.0
  %351 = vmatpush1.msra.mxu0 0.0
  %352 = vmatprep.subr.mxu0 0.0
  %353 = vmatpush1.msra.mxu0 0.0
  %354 = vmatprep.mubr.f32.mxu0 0.0
  %355 = vmatmul.mubr.f32.gmra.mrb[0].mxu0 %v127
  %v356 = vpop.f32.mrb[0].mxu0
  %v357 = vadd.f32 %v114, %v356
  %v358 = vpop.f32.mrb[0].mxu0
  %v359 = vadd.f32 %v118, %v358
  %360 = vdwg.mxu0
  %v361 = vmax.f32 %v215, 0.0
  %v362 = vmax.f32 %v217, 0.0
  %v363 = vmax.f32 %v286, 0.0
  %v364 = vmax.f32 %v288, 0.0
  %v365 = vmax.f32 %v357, 0.0
  %v366 = vmax.f32 %v359, 0.0
  %v367 = vld [vmem:[%s3] sm:$0xff]
  %v368 = vld [vmem:[%s3 + $0x8] sm:$0xff]
  %v369 = vld [vmem:[%s3 + $0x10] sm:$0xff]
  %v370 = vld [vmem:[%s3 + $0x18] sm:$0xff]
  %v371 = vld [vmem:[%s3 + $0x20] sm:$0xff]
  %v372 = vld [vmem:[%s3 + $0x28] sm:$0xff]
  %v373 = vld [vmem:[%s3 + $0x30] sm:$0xff]
  %v374 = vld [vmem:[%s3 + $0x38] sm:$0xff]
  %v375 = vld [vmem:[%s3 + $0x40] sm:$0xff]
  %v376 = vld [vmem:[%s3 + $0x48] sm:$0xff]
  %v377 = vld [vmem:[%s3 + $0x50] sm:$0xff]
  %v378 = vld [vmem:[%s3 + $0x58] sm:$0xff]
  %v379 = vld [vmem:[%s3 + $0x60] sm:$0xff]
  %v380 = vld [vmem:[%s3 + $0x68] sm:$0xff]
  %v381 = vld [vmem:[%s3 + $0x70] sm:$0xff]
  %v382 = vld [vmem:[%s3 + $0x78] sm:$0xff]
  %v383 = vld [vmem:[%s3 + $0x80] sm:$0xff]
  %v384 = vld [vmem:[%s3 + $0x88] sm:$0xff]
  %v385 = vld [vmem:[%s3 + $0x90] sm:$0xff]
  %v386 = vld [vmem:[%s3 + $0x98] sm:$0xff]
  %v387 = vld [vmem:[%s3 + $0xa0] sm:$0xff]
  %v388 = vld [vmem:[%s3 + $0xa8] sm:$0xff]
  %v389 = vld [vmem:[%s3 + $0xb0] sm:$0xff]
  %v390 = vld [vmem:[%s3 + $0xb8] sm:$0xff]
  %v391 = vld [vmem:[%s3 + $0xc0] sm:$0xff]
  %v392 = vld [vmem:[%s3 + $0xc8] sm:$0xff]
  %v393 = vld [vmem:[%s3 + $0xd0] sm:$0xff]
  %v394 = vld [vmem:[%s3 + $0xd8] sm:$0xff]
  %v395 = vld [vmem:[%s3 + $0xe0] sm:$0xff]
  %v396 = vld [vmem:[%s3 + $0xe8] sm:$0xff]
  %v397 = vld [vmem:[%s3 + $0xf0] sm:$0xff]
  %v398 = vld [vmem:[%s3 + $0xf8] sm:$0xff]
  %v399 = vld [vmem:[%s4] sm:$0x1]
  %v401 = vlaneseq
  %v402 = vshrl.u32 %v401, 7
  %v403 = vsub.s32 0, %v402
  %v404 = vrot.slane %v399, %v403
  %406 = vmatprep.subr.mxu0 0.0
  %407 = vmatpush1.msra.mxu0 %v367
  %408 = vmatprep.subr.mxu0 0.0
  %409 = vmatpush1.msra.mxu0 %v368
  %410 = vmatprep.subr.mxu0 0.0
  %411 = vmatpush1.msra.mxu0 %v369
  %412 = vmatprep.subr.mxu0 0.0
  %413 = vmatpush1.msra.mxu0 %v370
  %414 = vmatprep.subr.mxu0 0.0
  %415 = vmatpush1.msra.mxu0 %v371
  %416 = vmatprep.subr.mxu0 0.0
  %417 = vmatpush1.msra.mxu0 %v372
  %418 = vmatprep.subr.mxu0 0.0
  %419 = vmatpush1.msra.mxu0 %v373
  %420 = vmatprep.subr.mxu0 0.0
  %421 = vmatpush1.msra.mxu0 %v374
  %422 = vmatprep.subr.mxu0 0.0
  %423 = vmatpush1.msra.mxu0 %v375
  %424 = vmatprep.subr.mxu0 0.0
  %425 = vmatpush1.msra.mxu0 %v376
  %426 = vmatprep.subr.mxu0 0.0
  %427 = vmatpush1.msra.mxu0 %v377
  %428 = vmatprep.subr.mxu0 0.0
  %429 = vmatpush1.msra.mxu0 %v378
  %430 = vmatprep.subr.mxu0 0.0
  %431 = vmatpush1.msra.mxu0 %v379
  %432 = vmatprep.subr.mxu0 0.0
  %433 = vmatpush1.msra.mxu0 %v380
  %434 = vmatprep.subr.mxu0 0.0
  %435 = vmatpush1.msra.mxu0 %v381
  %436 = vmatprep.subr.mxu0 0.0
  %437 = vmatpush1.msra.mxu0 %v382
  %438 = vmatprep.subr.mxu0 0.0
  %439 = vmatpush1.msra.mxu0 %v383
  %440 = vmatprep.subr.mxu0 0.0
  %441 = vmatpush1.msra.mxu0 %v384
  %442 = vmatprep.subr.mxu0 0.0
  %443 = vmatpush1.msra.mxu0 %v385
  %444 = vmatprep.subr.mxu0 0.0
  %445 = vmatpush1.msra.mxu0 %v386
  %446 = vmatprep.subr.mxu0 0.0
  %447 = vmatpush1.msra.mxu0 %v387
  %448 = vmatprep.subr.mxu0 0.0
  %449 = vmatpush1.msra.mxu0 %v388
  %450 = vmatprep.subr.mxu0 0.0
  %451 = vmatpush1.msra.mxu0 %v389
  %452 = vmatprep.subr.mxu0 0.0
  %453 = vmatpush1.msra.mxu0 %v390
  %454 = vmatprep.subr.mxu0 0.0
  %455 = vmatpush1.msra.mxu0 %v391
  %456 = vmatprep.subr.mxu0 0.0
  %457 = vmatpush1.msra.mxu0 %v392
  %458 = vmatprep.subr.mxu0 0.0
  %459 = vmatpush1.msra.mxu0 %v393
  %460 = vmatprep.subr.mxu0 0.0
  %461 = vmatpush1.msra.mxu0 %v394
  %462 = vmatprep.subr.mxu0 0.0
  %463 = vmatpush1.msra.mxu0 %v395
  %464 = vmatprep.subr.mxu0 0.0
  %465 = vmatpush1.msra.mxu0 %v396
  %466 = vmatprep.subr.mxu0 0.0
  %467 = vmatpush1.msra.mxu0 %v397
  %468 = vmatprep.subr.mxu0 0.0
  %469 = vmatpush1.msra.mxu0 %v398
  %470 = vmatprep.mubr.f32.mxu0 %v362
  %471 = vmatmul.mubr.f32.gmra.mrb[0].mxu0 %v361
  %v472 = vpop.f32.mrb[0].mxu0
  %v473 = vadd.f32 %v404, %v472
  %v474 = vpop.f32.mrb[0].mxu0
  %475 = vdwg.mxu0
  %v476 = vmax.f32 %v473, 0.0
  %v477 = vld [vmem:[%s5] sm:$0x1]
  %v479 = vlaneseq
  %v480 = vshrl.u32 %v479, 7
  %v481 = vsub.s32 0, %v480
  %v482 = vrot.slane %v477, %v481
  %v484 = vmul.f32 %v476, %v482
  %485 = vadd.xlane.f32.xlu0 %v484
  %v486 = vpop.xlane.xlu0 %485
  %v487 = vld [vmem:[%s6] sm:$0x1]
  %v489 = vlaneseq
  %v490 = vshrl.u32 %v489, 7
  %v491 = vsub.s32 0, %v490
  %v492 = vrot.slane %v487, %v491
  %v494 = vadd.f32 %v486, %v492
  %v495 = vxor.u32 %v494, 2147483648
  %v496 = vmul.f32 %v495, 1.442695
  %v497 = vpow.pop %v496
  %v498 = vadd.f32 %v497, 1.0
  %v499 = vrcp.pop %v498
  %v500 = vmul.f32 1.0, %v499
  %s501 = scalar_lea.vmem %s3, 256
  %v502 = vld [vmem:[%s501] sm:$0xff]
  %v503 = vld [vmem:[%s501 + $0x8] sm:$0xff]
  %v504 = vld [vmem:[%s501 + $0x10] sm:$0xff]
  %v505 = vld [vmem:[%s501 + $0x18] sm:$0xff]
  %v506 = vld [vmem:[%s501 + $0x20] sm:$0xff]
  %v507 = vld [vmem:[%s501 + $0x28] sm:$0xff]
  %v508 = vld [vmem:[%s501 + $0x30] sm:$0xff]
  %v509 = vld [vmem:[%s501 + $0x38] sm:$0xff]
  %v510 = vld [vmem:[%s501 + $0x40] sm:$0xff]
  %v511 = vld [vmem:[%s501 + $0x48] sm:$0xff]
  %v512 = vld [vmem:[%s501 + $0x50] sm:$0xff]
  %v513 = vld [vmem:[%s501 + $0x58] sm:$0xff]
  %v514 = vld [vmem:[%s501 + $0x60] sm:$0xff]
  %v515 = vld [vmem:[%s501 + $0x68] sm:$0xff]
  %v516 = vld [vmem:[%s501 + $0x70] sm:$0xff]
  %v517 = vld [vmem:[%s501 + $0x78] sm:$0xff]
  %v518 = vld [vmem:[%s501 + $0x80] sm:$0xff]
  %v519 = vld [vmem:[%s501 + $0x88] sm:$0xff]
  %v520 = vld [vmem:[%s501 + $0x90] sm:$0xff]
  %v521 = vld [vmem:[%s501 + $0x98] sm:$0xff]
  %v522 = vld [vmem:[%s501 + $0xa0] sm:$0xff]
  %v523 = vld [vmem:[%s501 + $0xa8] sm:$0xff]
  %v524 = vld [vmem:[%s501 + $0xb0] sm:$0xff]
  %v525 = vld [vmem:[%s501 + $0xb8] sm:$0xff]
  %v526 = vld [vmem:[%s501 + $0xc0] sm:$0xff]
  %v527 = vld [vmem:[%s501 + $0xc8] sm:$0xff]
  %v528 = vld [vmem:[%s501 + $0xd0] sm:$0xff]
  %v529 = vld [vmem:[%s501 + $0xd8] sm:$0xff]
  %v530 = vld [vmem:[%s501 + $0xe0] sm:$0xff]
  %v531 = vld [vmem:[%s501 + $0xe8] sm:$0xff]
  %v532 = vld [vmem:[%s501 + $0xf0] sm:$0xff]
  %v533 = vld [vmem:[%s501 + $0xf8] sm:$0xff]
  %s534 = scalar_lea.vmem %s4, 1
  %v535 = vld [vmem:[%s534] sm:$0x1]
  %v537 = vlaneseq
  %v538 = vshrl.u32 %v537, 7
  %v539 = vsub.s32 0, %v538
  %v540 = vrot.slane %v535, %v539
  %542 = vmatprep.subr.mxu0 0.0
  %543 = vmatpush1.msra.mxu0 %v502
  %544 = vmatprep.subr.mxu0 0.0
  %545 = vmatpush1.msra.mxu0 %v503
  %546 = vmatprep.subr.mxu0 0.0
  %547 = vmatpush1.msra.mxu0 %v504
  %548 = vmatprep.subr.mxu0 0.0
  %549 = vmatpush1.msra.mxu0 %v505
  %550 = vmatprep.subr.mxu0 0.0
  %551 = vmatpush1.msra.mxu0 %v506
  %552 = vmatprep.subr.mxu0 0.0
  %553 = vmatpush1.msra.mxu0 %v507
  %554 = vmatprep.subr.mxu0 0.0
  %555 = vmatpush1.msra.mxu0 %v508
  %556 = vmatprep.subr.mxu0 0.0
  %557 = vmatpush1.msra.mxu0 %v509
  %558 = vmatprep.subr.mxu0 0.0
  %559 = vmatpush1.msra.mxu0 %v510
  %560 = vmatprep.subr.mxu0 0.0
  %561 = vmatpush1.msra.mxu0 %v511
  %562 = vmatprep.subr.mxu0 0.0
  %563 = vmatpush1.msra.mxu0 %v512
  %564 = vmatprep.subr.mxu0 0.0
  %565 = vmatpush1.msra.mxu0 %v513
  %566 = vmatprep.subr.mxu0 0.0
  %567 = vmatpush1.msra.mxu0 %v514
  %568 = vmatprep.subr.mxu0 0.0
  %569 = vmatpush1.msra.mxu0 %v515
  %570 = vmatprep.subr.mxu0 0.0
  %571 = vmatpush1.msra.mxu0 %v516
  %572 = vmatprep.subr.mxu0 0.0
  %573 = vmatpush1.msra.mxu0 %v517
  %574 = vmatprep.subr.mxu0 0.0
  %575 = vmatpush1.msra.mxu0 %v518
  %576 = vmatprep.subr.mxu0 0.0
  %577 = vmatpush1.msra.mxu0 %v519
  %578 = vmatprep.subr.mxu0 0.0
  %579 = vmatpush1.msra.mxu0 %v520
  %580 = vmatprep.subr.mxu0 0.0
  %581 = vmatpush1.msra.mxu0 %v521
  %582 = vmatprep.subr.mxu0 0.0
  %583 = vmatpush1.msra.mxu0 %v522
  %584 = vmatprep.subr.mxu0 0.0
  %585 = vmatpush1.msra.mxu0 %v523
  %586 = vmatprep.subr.mxu0 0.0
  %587 = vmatpush1.msra.mxu0 %v524
  %588 = vmatprep.subr.mxu0 0.0
  %589 = vmatpush1.msra.mxu0 %v525
  %590 = vmatprep.subr.mxu0 0.0
  %591 = vmatpush1.msra.mxu0 %v526
  %592 = vmatprep.subr.mxu0 0.0
  %593 = vmatpush1.msra.mxu0 %v527
  %594 = vmatprep.subr.mxu0 0.0
  %595 = vmatpush1.msra.mxu0 %v528
  %596 = vmatprep.subr.mxu0 0.0
  %597 = vmatpush1.msra.mxu0 %v529
  %598 = vmatprep.subr.mxu0 0.0
  %599 = vmatpush1.msra.mxu0 %v530
  %600 = vmatprep.subr.mxu0 0.0
  %601 = vmatpush1.msra.mxu0 %v531
  %602 = vmatprep.subr.mxu0 0.0
  %603 = vmatpush1.msra.mxu0 %v532
  %604 = vmatprep.subr.mxu0 0.0
  %605 = vmatpush1.msra.mxu0 %v533
  %606 = vmatprep.mubr.f32.mxu0 %v364
  %607 = vmatmul.mubr.f32.gmra.mrb[0].mxu0 %v363
  %v608 = vpop.f32.mrb[0].mxu0
  %v609 = vadd.f32 %v540, %v608
  %v610 = vpop.f32.mrb[0].mxu0
  %611 = vdwg.mxu0
  %v612 = vmax.f32 %v609, 0.0
  %s613 = scalar_lea.vmem %s5, 1
  %v614 = vld [vmem:[%s613] sm:$0x1]
  %v616 = vlaneseq
  %v617 = vshrl.u32 %v616, 7
  %v618 = vsub.s32 0, %v617
  %v619 = vrot.slane %v614, %v618
  %v621 = vmul.f32 %v612, %v619
  %622 = vadd.xlane.f32.xlu0 %v621
  %v623 = vpop.xlane.xlu0 %622
  %s624 = scalar_lea.vmem %s6, 1
  %v625 = vld [vmem:[%s624] sm:$0x1]
  %v627 = vlaneseq
  %v628 = vshrl.u32 %v627, 7
  %v629 = vsub.s32 0, %v628
  %v630 = vrot.slane %v625, %v629
  %v632 = vadd.f32 %v623, %v630
  %v633 = vxor.u32 %v632, 2147483648
  %v634 = vmul.f32 %v633, 1.442695
  %v635 = vpow.pop %v634
  %v636 = vadd.f32 %v635, 1.0
  %v637 = vrcp.pop %v636
  %v638 = vmul.f32 1.0, %v637
  %s639 = scalar_lea.vmem %s3, 512
  %v640 = vld [vmem:[%s639] sm:$0xff]
  %v641 = vld [vmem:[%s639 + $0x8] sm:$0xff]
  %v642 = vld [vmem:[%s639 + $0x10] sm:$0xff]
  %v643 = vld [vmem:[%s639 + $0x18] sm:$0xff]
  %v644 = vld [vmem:[%s639 + $0x20] sm:$0xff]
  %v645 = vld [vmem:[%s639 + $0x28] sm:$0xff]
  %v646 = vld [vmem:[%s639 + $0x30] sm:$0xff]
  %v647 = vld [vmem:[%s639 + $0x38] sm:$0xff]
  %v648 = vld [vmem:[%s639 + $0x40] sm:$0xff]
  %v649 = vld [vmem:[%s639 + $0x48] sm:$0xff]
  %v650 = vld [vmem:[%s639 + $0x50] sm:$0xff]
  %v651 = vld [vmem:[%s639 + $0x58] sm:$0xff]
  %v652 = vld [vmem:[%s639 + $0x60] sm:$0xff]
  %v653 = vld [vmem:[%s639 + $0x68] sm:$0xff]
  %v654 = vld [vmem:[%s639 + $0x70] sm:$0xff]
  %v655 = vld [vmem:[%s639 + $0x78] sm:$0xff]
  %v656 = vld [vmem:[%s639 + $0x80] sm:$0xff]
  %v657 = vld [vmem:[%s639 + $0x88] sm:$0xff]
  %v658 = vld [vmem:[%s639 + $0x90] sm:$0xff]
  %v659 = vld [vmem:[%s639 + $0x98] sm:$0xff]
  %v660 = vld [vmem:[%s639 + $0xa0] sm:$0xff]
  %v661 = vld [vmem:[%s639 + $0xa8] sm:$0xff]
  %v662 = vld [vmem:[%s639 + $0xb0] sm:$0xff]
  %v663 = vld [vmem:[%s639 + $0xb8] sm:$0xff]
  %v664 = vld [vmem:[%s639 + $0xc0] sm:$0xff]
  %v665 = vld [vmem:[%s639 + $0xc8] sm:$0xff]
  %v666 = vld [vmem:[%s639 + $0xd0] sm:$0xff]
  %v667 = vld [vmem:[%s639 + $0xd8] sm:$0xff]
  %v668 = vld [vmem:[%s639 + $0xe0] sm:$0xff]
  %v669 = vld [vmem:[%s639 + $0xe8] sm:$0xff]
  %v670 = vld [vmem:[%s639 + $0xf0] sm:$0xff]
  %v671 = vld [vmem:[%s639 + $0xf8] sm:$0xff]
  %s672 = scalar_lea.vmem %s4, 2
  %v673 = vld [vmem:[%s672] sm:$0x1]
  %v675 = vlaneseq
  %v676 = vshrl.u32 %v675, 7
  %v677 = vsub.s32 0, %v676
  %v678 = vrot.slane %v673, %v677
  %680 = vmatprep.subr.mxu0 0.0
  %681 = vmatpush1.msra.mxu0 %v640
  %682 = vmatprep.subr.mxu0 0.0
  %683 = vmatpush1.msra.mxu0 %v641
  %684 = vmatprep.subr.mxu0 0.0
  %685 = vmatpush1.msra.mxu0 %v642
  %686 = vmatprep.subr.mxu0 0.0
  %687 = vmatpush1.msra.mxu0 %v643
  %688 = vmatprep.subr.mxu0 0.0
  %689 = vmatpush1.msra.mxu0 %v644
  %690 = vmatprep.subr.mxu0 0.0
  %691 = vmatpush1.msra.mxu0 %v645
  %692 = vmatprep.subr.mxu0 0.0
  %693 = vmatpush1.msra.mxu0 %v646
  %694 = vmatprep.subr.mxu0 0.0
  %695 = vmatpush1.msra.mxu0 %v647
  %696 = vmatprep.subr.mxu0 0.0
  %697 = vmatpush1.msra.mxu0 %v648
  %698 = vmatprep.subr.mxu0 0.0
  %699 = vmatpush1.msra.mxu0 %v649
  %700 = vmatprep.subr.mxu0 0.0
  %701 = vmatpush1.msra.mxu0 %v650
  %702 = vmatprep.subr.mxu0 0.0
  %703 = vmatpush1.msra.mxu0 %v651
  %704 = vmatprep.subr.mxu0 0.0
  %705 = vmatpush1.msra.mxu0 %v652
  %706 = vmatprep.subr.mxu0 0.0
  %707 = vmatpush1.msra.mxu0 %v653
  %708 = vmatprep.subr.mxu0 0.0
  %709 = vmatpush1.msra.mxu0 %v654
  %710 = vmatprep.subr.mxu0 0.0
  %711 = vmatpush1.msra.mxu0 %v655
  %712 = vmatprep.subr.mxu0 0.0
  %713 = vmatpush1.msra.mxu0 %v656
  %714 = vmatprep.subr.mxu0 0.0
  %715 = vmatpush1.msra.mxu0 %v657
  %716 = vmatprep.subr.mxu0 0.0
  %717 = vmatpush1.msra.mxu0 %v658
  %718 = vmatprep.subr.mxu0 0.0
  %719 = vmatpush1.msra.mxu0 %v659
  %720 = vmatprep.subr.mxu0 0.0
  %721 = vmatpush1.msra.mxu0 %v660
  %722 = vmatprep.subr.mxu0 0.0
  %723 = vmatpush1.msra.mxu0 %v661
  %724 = vmatprep.subr.mxu0 0.0
  %725 = vmatpush1.msra.mxu0 %v662
  %726 = vmatprep.subr.mxu0 0.0
  %727 = vmatpush1.msra.mxu0 %v663
  %728 = vmatprep.subr.mxu0 0.0
  %729 = vmatpush1.msra.mxu0 %v664
  %730 = vmatprep.subr.mxu0 0.0
  %731 = vmatpush1.msra.mxu0 %v665
  %732 = vmatprep.subr.mxu0 0.0
  %733 = vmatpush1.msra.mxu0 %v666
  %734 = vmatprep.subr.mxu0 0.0
  %735 = vmatpush1.msra.mxu0 %v667
  %736 = vmatprep.subr.mxu0 0.0
  %737 = vmatpush1.msra.mxu0 %v668
  %738 = vmatprep.subr.mxu0 0.0
  %739 = vmatpush1.msra.mxu0 %v669
  %740 = vmatprep.subr.mxu0 0.0
  %741 = vmatpush1.msra.mxu0 %v670
  %742 = vmatprep.subr.mxu0 0.0
  %743 = vmatpush1.msra.mxu0 %v671
  %744 = vmatprep.mubr.f32.mxu0 %v366
  %745 = vmatmul.mubr.f32.gmra.mrb[0].mxu0 %v365
  %v746 = vpop.f32.mrb[0].mxu0
  %v747 = vadd.f32 %v678, %v746
  %v748 = vpop.f32.mrb[0].mxu0
  %749 = vdwg.mxu0
  %v750 = vmax.f32 %v747, 0.0
  %s751 = scalar_lea.vmem %s5, 2
  %v752 = vld [vmem:[%s751] sm:$0x1]
  %v754 = vlaneseq
  %v755 = vshrl.u32 %v754, 7
  %v756 = vsub.s32 0, %v755
  %v757 = vrot.slane %v752, %v756
  %v759 = vmul.f32 %v750, %v757
  %760 = vadd.xlane.f32.xlu0 %v759
  %v761 = vpop.xlane.xlu0 %760
  %s762 = scalar_lea.vmem %s6, 2
  %v763 = vld [vmem:[%s762] sm:$0x1]
  %v765 = vlaneseq
  %v766 = vshrl.u32 %v765, 7
  %v767 = vsub.s32 0, %v766
  %v768 = vrot.slane %v763, %v767
  %v770 = vadd.f32 %v761, %v768
  %v771 = vxor.u32 %v770, 2147483648
  %v772 = vmul.f32 %v771, 1.442695
  %v773 = vpow.pop %v772
  %v774 = vadd.f32 %v773, 1.0
  %v775 = vrcp.pop %v774
  %v776 = vmul.f32 1.0, %v775
  %778 = vrot.lane.b32.xlu0 %v638, 1
  %v779 = vpop.permute.xlu0 %778
  %782 = vrot.lane.b32.xlu0 %v776, 2
  %v783 = vpop.permute.xlu0 %782
  %vm785 = vcmask 7168
  %v786 = vsel %vm785, %v500, %v779
  %vm787 = vcmask 15360
  %v788 = vsel %vm787, %v786, %v783
  %vm789 = vcmask 23552
  %790 = vst.msk [vmem:[%s7] sm:$0xff] %vm789, %v788
  // Predicated region
  $region30: #{forward.1} parent=0 // pred_check
    _
  $region31: #{forward.1} parent=0 // pred_check_branch
    %792 = sbr.rel (0) target = $region33
  $region32: #{forward.1} parent=0 // pred_region
    _
  $region33: #{forward.1} parent=0 // pred_fallthru
    _
  // Predicated region
  $region34: #{forward.1} parent=0 // pred_check
    _
  $region35: #{forward.1} parent=0 // pred_check_branch
    %794 = sbr.rel (0) target = $region37
  $region36: #{forward.1} parent=0 // pred_region
    _
  $region37: #{forward.1} parent=0 // pred_fallthru
    _

</llo_original>
